<compile_context>
chip_gen: v7x
topology: tpu7x:2x2x1
jax: 0.10.0
libtpu: 0.0.40
codegen_flags: <defaults>
</compile_context>

<pallas_src>
import jax
import jax.numpy as jnp
from jax.experimental import pallas as pl
from jax.experimental.pallas import tpu as pltpu


def _round_up(x, m):
    return (x + m - 1) // m * m


def _ffn_kernel(x_ref, w1_ref, b1_ref, w2_ref, b2_ref, o_ref):
    # x_ref : (tm, C) tile of the flattened input (lane dim = full C)
    # w1_ref/w2_ref : (C, C) weights pre-transposed so we compute x @ W
    # b1_ref/b2_ref : (1, C) biases (broadcast over rows)
    x = x_ref[...]
    h = jnp.dot(x, w1_ref[...], preferred_element_type=jnp.float32)
    h = h + b1_ref[...].astype(jnp.float32)
    h = jnp.maximum(h, 0.0)                      # ReLU (dropout1 = identity, eval)
    h = h.astype(w2_ref.dtype)                   # keep second matmul on the MXU fast path
    y = jnp.dot(h, w2_ref[...], preferred_element_type=jnp.float32)
    y = y + b2_ref[...].astype(jnp.float32)
    # dropout2 = identity; residual added in f32, single final cast.
    o_ref[...] = (y + x.astype(jnp.float32)).astype(o_ref.dtype)


def pointwise_ffn(x, w1, b1, w2, b2, *, tm=4096):
    """x: (N, L, C). w1, w2: (C_out, C_in) PyTorch Conv1d weights (kernel dim
    squeezed). b1, b2: (C,). Eval-mode dropout (identity)."""
    N, L, C = x.shape
    M = N * L
    itemsize = jnp.dtype(x.dtype).itemsize

    # ---- row tile selection -------------------------------------------------
    tm = _round_up(min(tm, M), 8)                       # never exceed (rounded) M
    # v7x megacore: keep >= 8 grid steps when the problem is big enough.
    if M >= 8 * 256:
        tm = min(tm, _round_up(pl.cdiv(M, 8), 8))
    # VMEM budget: 2x in + 2x out double buffers (streamed dtype) + f32 temps.
    per_row_bytes = 4 * C * itemsize + 3 * C * 4
    tm_budget = max(8, ((24 << 20) // per_row_bytes) // 8 * 8)
    tm = max(8, min(tm, tm_budget))

    grid = (pl.cdiv(M, tm),)

    # ---- operands (no activation padding; weights transposed once) ----------
    x2d = x.reshape(M, C)
    w1t = jnp.asarray(w1, dtype=x.dtype).T              # (C_in, C_out) -> x @ W
    w2t = jnp.asarray(w2, dtype=x.dtype).T
    b1r = jnp.asarray(b1, dtype=x.dtype).reshape(1, C)
    b2r = jnp.asarray(b2, dtype=x.dtype).reshape(1, C)

    # ---- scheduling hints ----------------------------------------------------
    cost = pl.CostEstimate(
        flops=4 * M * C * C,                              # two (tm,C)x(C,C) matmuls
        transcendentals=0,
        bytes_accessed=(2 * M * C + 2 * C * C + 2 * C) * itemsize,
    )
    vmem_bytes = (4 * tm * C * itemsize                   # x in/out double buffers
                  + 3 * tm * C * 4                        # f32 intermediates
                  + 4 * C * C * itemsize                  # resident weights (2 bufs)
                  + 4 * C * itemsize)                     # biases
    vmem_limit = int(min(max(vmem_bytes + (4 << 20), 16 << 20), 48 << 20))

    out2d = pl.pallas_call(
        _ffn_kernel,
        out_shape=jax.ShapeDtypeStruct((M, C), x.dtype),
        grid_spec=pltpu.PrefetchScalarGridSpec(
            num_scalar_prefetch=0,
            grid=grid,
            in_specs=[
                pl.BlockSpec((tm, C), lambda i: (i, 0)),   # x tile (row-blocked)
                pl.BlockSpec((C, C), lambda i: (0, 0)),    # W1^T (VMEM-resident)
                pl.BlockSpec((1, C), lambda i: (0, 0)),    # b1   (VMEM-resident)
                pl.BlockSpec((C, C), lambda i: (0, 0)),    # W2^T (VMEM-resident)
                pl.BlockSpec((1, C), lambda i: (0, 0)),    # b2   (VMEM-resident)
            ],
            out_specs=pl.BlockSpec((tm, C), lambda i: (i, 0)),
        ),
        compiler_params=pltpu.CompilerParams(
            dimension_semantics=("parallel",),
            vmem_limit_bytes=vmem_limit,
        ),
        cost_estimate=cost,
        # Residual FFN: in/out specs are identical 1:1 row maps -> hazard-free
        # aliasing; saves one (M, C) HBM allocation on a bandwidth-bound kernel.
        input_output_aliases={0: 0},
    )(x2d, w1t, b1r, w2t, b2r)

    return out2d.reshape(N, L, C)


def _reference(x, w1, b1, w2, b2):
    # Pure-JAX reference of the PyTorch forward (eval-mode dropout).
    h = jnp.einsum("nlc,oc->nlo", x, w1) + b1
    h = jnp.maximum(h, 0.0)
    y = jnp.einsum("nlc,oc->nlo", h, w2) + b2
    return y + x


if __name__ == "__main__":
    N, L, C = 2, 8, 32   # batch=2, seq=8, hidden_units=32
    key = jax.random.PRNGKey(0)
    kx, k1, k2, k3, k4 = jax.random.split(key, 5)

    x = jax.random.normal(kx, (N, L, C), dtype=jnp.float32)
    # Deterministic synthetic parameters (Conv1d(C, C, k=1) -> (C_out, C_in)).
    w1 = jax.random.normal(k1, (C, C), dtype=jnp.float32) * 0.1
    b1 = jax.random.normal(k2, (C,), dtype=jnp.float32) * 0.1
    w2 = jax.random.normal(k3, (C, C), dtype=jnp.float32) * 0.1
    b2 = jax.random.normal(k4, (C,), dtype=jnp.float32) * 0.1

    out = pointwise_ffn(x, w1, b1, w2, b2)
    out = jax.block_until_ready(out)

    ref = _reference(x, w1, b1, w2, b2)
    assert out.shape == x.shape and out.dtype == x.dtype
    assert jnp.allclose(out, ref, atol=1e-5, rtol=1e-5)

    print("KERNEL_OK")
</pallas_src>

<mosaic_0001>
module attributes {stable_mosaic.version = 11 : i64} {
  func.func @_ffn_kernel(%arg0: i32, %arg1: memref<16x32xf32, #tpu.memory_space<vmem>>, %arg2: memref<32x32xf32, #tpu.memory_space<vmem>>, %arg3: memref<1x32xf32, #tpu.memory_space<vmem>>, %arg4: memref<32x32xf32, #tpu.memory_space<vmem>>, %arg5: memref<1x32xf32, #tpu.memory_space<vmem>>, %arg6: memref<16x32xf32, #tpu.memory_space<vmem>>) attributes {dimension_semantics = [#tpu.dimension_semantics<parallel>], iteration_bounds = array<i64: 1>, scalar_prefetch = 0 : i64, scratch_operands = 0 : i64, tpu.core_type = #tpu.core_type<tc>, window_params = [{transform_indices = @transform_0, window_bounds = array<i64: 16, 32>}, {pipeline_mode = #tpu.pipeline_mode<synchronous>, transform_indices = @transform_1, window_bounds = array<i64: 32, 32>}, {pipeline_mode = #tpu.pipeline_mode<synchronous>, transform_indices = @transform_2, window_bounds = array<i64: 1, 32>}, {pipeline_mode = #tpu.pipeline_mode<synchronous>, transform_indices = @transform_3, window_bounds = array<i64: 32, 32>}, {pipeline_mode = #tpu.pipeline_mode<synchronous>, transform_indices = @transform_4, window_bounds = array<i64: 1, 32>}, {transform_indices = @transform_5, window_bounds = array<i64: 16, 32>}]} {
    %c0 = arith.constant 0 : index
    %c0_0 = arith.constant 0 : index
    %0 = vector.load %arg1[%c0, %c0_0] : memref<16x32xf32, #tpu.memory_space<vmem>>, vector<16x32xf32>
    %c0_1 = arith.constant 0 : index
    %c0_2 = arith.constant 0 : index
    %1 = vector.load %arg2[%c0_1, %c0_2] : memref<32x32xf32, #tpu.memory_space<vmem>>, vector<32x32xf32>
    %cst = arith.constant dense<0.000000e+00> : vector<16x32xf32>
    %2 = tpu.matmul %0, %1, %cst {dimension_numbers = #tpu.dot_dimension_numbers<[1], [0], [0], [1], [0, 0, 1, 1], [], []>} : vector<16x32xf32>, vector<32x32xf32>, vector<16x32xf32> -> vector<16x32xf32>
    %c0_3 = arith.constant 0 : index
    %c0_4 = arith.constant 0 : index
    %3 = vector.load %arg3[%c0_3, %c0_4] : memref<1x32xf32, #tpu.memory_space<vmem>>, vector<1x32xf32>
    %4 = vector.broadcast %3 : vector<1x32xf32> to vector<16x32xf32>
    %5 = arith.addf %2, %4 : vector<16x32xf32>
    %cst_5 = arith.constant 0.000000e+00 : f32
    %6 = vector.broadcast %cst_5 : f32 to vector<16x32xf32>
    %7 = arith.maximumf %5, %6 : vector<16x32xf32>
    %c0_6 = arith.constant 0 : index
    %c0_7 = arith.constant 0 : index
    %8 = vector.load %arg4[%c0_6, %c0_7] : memref<32x32xf32, #tpu.memory_space<vmem>>, vector<32x32xf32>
    %cst_8 = arith.constant dense<0.000000e+00> : vector<16x32xf32>
    %9 = tpu.matmul %7, %8, %cst_8 {dimension_numbers = #tpu.dot_dimension_numbers<[1], [0], [0], [1], [0, 0, 1, 1], [], []>} : vector<16x32xf32>, vector<32x32xf32>, vector<16x32xf32> -> vector<16x32xf32>
    %c0_9 = arith.constant 0 : index
    %c0_10 = arith.constant 0 : index
    %10 = vector.load %arg5[%c0_9, %c0_10] : memref<1x32xf32, #tpu.memory_space<vmem>>, vector<1x32xf32>
    %11 = vector.broadcast %10 : vector<1x32xf32> to vector<16x32xf32>
    %12 = arith.addf %9, %11 : vector<16x32xf32>
    %13 = arith.addf %12, %0 : vector<16x32xf32>
    %c0_11 = arith.constant 0 : index
    %c0_12 = arith.constant 0 : index
    %14 = vector.load %arg6[%c0_11, %c0_12] : memref<16x32xf32, #tpu.memory_space<vmem>>, vector<16x32xf32>
    tpu.vector_store %arg6[%c0_11, %c0_12], %13 {strides = array<i32>} : memref<16x32xf32, #tpu.memory_space<vmem>>, vector<16x32xf32>,
    return
  }
  func.func @transform_0(%arg0: i32) -> (i32, i32) {
    %c0_i32 = arith.constant 0 : i32
    %c0_i32_0 = arith.constant 0 : i32
    return %arg0, %c0_i32 : i32, i32
  }
  func.func @transform_1(%arg0: i32) -> (i32, i32) {
    %c0_i32 = arith.constant 0 : i32
    %c0_i32_0 = arith.constant 0 : i32
    %c0_i32_1 = arith.constant 0 : i32
    return %c0_i32, %c0_i32_0 : i32, i32
  }
  func.func @transform_2(%arg0: i32) -> (i32, i32) {
    %c0_i32 = arith.constant 0 : i32
    %c0_i32_0 = arith.constant 0 : i32
    %c0_i32_1 = arith.constant 0 : i32
    return %c0_i32, %c0_i32_0 : i32, i32
  }
  func.func @transform_3(%arg0: i32) -> (i32, i32) {
    %c0_i32 = arith.constant 0 : i32
    %c0_i32_0 = arith.constant 0 : i32
    %c0_i32_1 = arith.constant 0 : i32
    return %c0_i32, %c0_i32_0 : i32, i32
  }
  func.func @transform_4(%arg0: i32) -> (i32, i32) {
    %c0_i32 = arith.constant 0 : i32
    %c0_i32_0 = arith.constant 0 : i32
    %c0_i32_1 = arith.constant 0 : i32
    return %c0_i32, %c0_i32_0 : i32, i32
  }
  func.func @transform_5(%arg0: i32) -> (i32, i32) {
    %c0_i32 = arith.constant 0 : i32
    %c0_i32_0 = arith.constant 0 : i32
    return %arg0, %c0_i32 : i32, i32
  }
}

</mosaic_0001>

<llo_original>
// kernel: tpu_custom_call.1
$region0: #{tpu_custom_call.1}
  #allocation0 [shape = 'u32[]', space=smem, size = 0x4, offset = 0x4, fixed_abs, tag = 'smem constant byte address 0x4 - core index']
  #allocation1 [shape = 'u32[144,128]{1,0:T(1,128)}', space=vmem, size = 0x12000, scoped, tag = 'internal scratch']
  %s0 = inlined_call_operand.hbm [shape: f32[16,32], index: 0, kind: input, shape index: {}, may-alias: {0,5}]
  %s1 = inlined_call_operand.vmem [shape: f32[32,32], index: 1, kind: input, shape index: {}]
  %s2 = inlined_call_operand.vmem [shape: f32[1,32], index: 2, kind: input, shape index: {}]
  %s3 = inlined_call_operand.hbm [shape: f32[32,32], index: 3, kind: input, shape index: {}]
  %s4 = inlined_call_operand.vmem [shape: f32[1,32], index: 4, kind: input, shape index: {}]
  %s5 = inlined_call_operand.hbm [shape: f32[16,32], index: 5, kind: output, shape index: {}, may-alias: {0,5}]
  %s6 = sld [smem:[#allocation0]]
  $region38: #{tpu_custom_call.1} parent=0
    _
  %s8 = ssub.s32 1, %s6
  %s9 = scalar_select 0, %s8, %s6
  $region1: #{tpu_custom_call.1} parent=0
    #allocation2 [shape = 'u8[8192]{0}', space=vmem, size = 0x2000, scoped, tag = 'input window, operand 0, single buffered']
    #allocation3 [shape = 's32[1]{0}', space=sflag, size = 0x4, scoped, tag = 'scoped memory for tpu_custom_call.1']
    #allocation4 [shape = 's32[1]{0}', space=sflag, size = 0x4, scoped, tag = 'scoped memory for tpu_custom_call.1']
    #allocation5 [shape = 'u8[16384]{0}', space=vmem, size = 0x4000, scoped, tag = 'input window, operand 3, single buffered']
    #allocation6 [shape = 's32[1]{0}', space=sflag, size = 0x4, scoped, tag = 'scoped memory for tpu_custom_call.1']
    #allocation7 [shape = 'u8[8192]{0}', space=vmem, size = 0x2000, scoped, tag = 'output window, operand 0, single buffered']
    %10 = vsyncpa [#allocation3], 0
    %11 = vsyncpa [#allocation6], 0
    %12 = vsyncpa [#allocation4], 0
    // Predicated region
    $region2: #{tpu_custom_call.1} parent=1 // pred_check
      _
    $region3: #{tpu_custom_call.1} parent=1 // pred_check_branch
      %14 = sbr.rel (0) target = $region5
    $region4: #{tpu_custom_call.1} parent=1 // pred_region
      %s16 = ssub.s32 256, 256
      %17 = vsyncadd [#allocation3], %s16
      %s18 = sshll.u32 [#allocation2], 4
      %s19 = int_to_ptr.vmem [resolvable:$true] %s18
      %24 = dma.hbm_to_vmem [thread:$0]  %s0, 256, %s19, [#allocation3], 128, 128, 8
    $region5: #{tpu_custom_call.1} parent=1 // pred_fallthru
      _
    // Predicated region
    $region6: #{tpu_custom_call.1} parent=1 // pred_check
      _
    $region7: #{tpu_custom_call.1} parent=1 // pred_check_branch
      %26 = sbr.rel (0) target = $region9
    $region8: #{tpu_custom_call.1} parent=1 // pred_region
      _
    $region9: #{tpu_custom_call.1} parent=1 // pred_fallthru
      _
    // Predicated region
    $region10: #{tpu_custom_call.1} parent=1 // pred_check
      _
    $region11: #{tpu_custom_call.1} parent=1 // pred_check_branch
      %28 = sbr.rel (0) target = $region13
    $region12: #{tpu_custom_call.1} parent=1 // pred_region
      _
    $region13: #{tpu_custom_call.1} parent=1 // pred_fallthru
      _
    // Predicated region
    $region14: #{tpu_custom_call.1} parent=1 // pred_check
      _
    $region15: #{tpu_custom_call.1} parent=1 // pred_check_branch
      %30 = sbr.rel (0) target = $region17
    $region16: #{tpu_custom_call.1} parent=1 // pred_region
      %s32 = ssub.s32 512, 512
      %33 = vsyncadd [#allocation6], %s32
      %s34 = sshll.u32 [#allocation5], 4
      %s35 = int_to_ptr.vmem [resolvable:$true] %s34
      %40 = dma.hbm_to_vmem [thread:$0]  %s3, 512, %s35, [#allocation6], 128, 128, 8
    $region17: #{tpu_custom_call.1} parent=1 // pred_fallthru
      _
    // Predicated region
    $region18: #{tpu_custom_call.1} parent=1 // pred_check
      _
    $region19: #{tpu_custom_call.1} parent=1 // pred_check_branch
      %42 = sbr.rel (0) target = $region21
    $region20: #{tpu_custom_call.1} parent=1 // pred_region
      _
    $region21: #{tpu_custom_call.1} parent=1 // pred_fallthru
      _
    // Predicated region
    $region22: #{tpu_custom_call.1} parent=1 // pred_check
      _
    $region23: #{tpu_custom_call.1} parent=1 // pred_check_branch
      %44 = sbr.rel (0) target = $region25
    $region24: #{tpu_custom_call.1} parent=1 // pred_region
      %45 = dma.done [#allocation3], 256
    $region25: #{tpu_custom_call.1} parent=1 // pred_fallthru
      _
    // Predicated region
    $region26: #{tpu_custom_call.1} parent=1 // pred_check
      _
    $region27: #{tpu_custom_call.1} parent=1 // pred_check_branch
      %47 = sbr.rel (0) target = $region29
    $region28: #{tpu_custom_call.1} parent=1 // pred_region
      %48 = dma.done [#allocation6], 512
    $region29: #{tpu_custom_call.1} parent=1 // pred_fallthru
      _
    %v49 = vld [vmem:[#allocation2] sm:$0xff]
    %v50 = vld [vmem:[#allocation2 + $0x8] sm:$0xff]
    %v51 = vld [vmem:[%s1] sm:$0xff]
    %v52 = vld [vmem:[%s1 + $0x8] sm:$0xff]
    %v53 = vld [vmem:[%s1 + $0x10] sm:$0xff]
    %v54 = vld [vmem:[%s1 + $0x18] sm:$0xff]
    %v55 = vld [vmem:[%s2] sm:$0x1]
    %v57 = vlaneseq
    %v58 = vshrl.u32 %v57, 7
    %v59 = vsub.s32 0, %v58
    %v60 = vrot.slane %v55, %v59
    %vm62 = vcmask 261120
    %v64 = vsel %vm62, %v49, 0
    %v67 = vsel %vm62, %v50, 0
    %69 = vmatprep.subr.mxu0 0.0
    %70 = vmatpush1.msra.mxu0 %v51
    %71 = vmatprep.subr.mxu0 0.0
    %72 = vmatpush1.msra.mxu0 %v52
    %73 = vmatprep.subr.mxu0 0.0
    %74 = vmatpush1.msra.mxu0 %v53
    %75 = vmatprep.subr.mxu0 0.0
    %76 = vmatpush1.msra.mxu0 %v54
    %77 = vmatprep.subr.mxu0 0.0
    %78 = vmatpush1.msra.mxu0 0.0
    %79 = vmatprep.subr.mxu0 0.0
    %80 = vmatpush1.msra.mxu0 0.0
    %81 = vmatprep.subr.mxu0 0.0
    %82 = vmatpush1.msra.mxu0 0.0
    %83 = vmatprep.subr.mxu0 0.0
    %84 = vmatpush1.msra.mxu0 0.0
    %85 = vmatprep.subr.mxu0 0.0
    %86 = vmatpush1.msra.mxu0 0.0
    %87 = vmatprep.subr.mxu0 0.0
    %88 = vmatpush1.msra.mxu0 0.0
    %89 = vmatprep.subr.mxu0 0.0
    %90 = vmatpush1.msra.mxu0 0.0
    %91 = vmatprep.subr.mxu0 0.0
    %92 = vmatpush1.msra.mxu0 0.0
    %93 = vmatprep.subr.mxu0 0.0
    %94 = vmatpush1.msra.mxu0 0.0
    %95 = vmatprep.subr.mxu0 0.0
    %96 = vmatpush1.msra.mxu0 0.0
    %97 = vmatprep.subr.mxu0 0.0
    %98 = vmatpush1.msra.mxu0 0.0
    %99 = vmatprep.subr.mxu0 0.0
    %100 = vmatpush1.msra.mxu0 0.0
    %101 = vmatprep.subr.mxu0 0.0
    %102 = vmatpush1.msra.mxu0 0.0
    %103 = vmatprep.subr.mxu0 0.0
    %104 = vmatpush1.msra.mxu0 0.0
    %105 = vmatprep.subr.mxu0 0.0
    %106 = vmatpush1.msra.mxu0 0.0
    %107 = vmatprep.subr.mxu0 0.0
    %108 = vmatpush1.msra.mxu0 0.0
    %109 = vmatprep.subr.mxu0 0.0
    %110 = vmatpush1.msra.mxu0 0.0
    %111 = vmatprep.subr.mxu0 0.0
    %112 = vmatpush1.msra.mxu0 0.0
    %113 = vmatprep.subr.mxu0 0.0
    %114 = vmatpush1.msra.mxu0 0.0
    %115 = vmatprep.subr.mxu0 0.0
    %116 = vmatpush1.msra.mxu0 0.0
    %117 = vmatprep.subr.mxu0 0.0
    %118 = vmatpush1.msra.mxu0 0.0
    %119 = vmatprep.subr.mxu0 0.0
    %120 = vmatpush1.msra.mxu0 0.0
    %121 = vmatprep.subr.mxu0 0.0
    %122 = vmatpush1.msra.mxu0 0.0
    %123 = vmatprep.subr.mxu0 0.0
    %124 = vmatpush1.msra.mxu0 0.0
    %125 = vmatprep.subr.mxu0 0.0
    %126 = vmatpush1.msra.mxu0 0.0
    %127 = vmatprep.subr.mxu0 0.0
    %128 = vmatpush1.msra.mxu0 0.0
    %129 = vmatprep.subr.mxu0 0.0
    %130 = vmatpush1.msra.mxu0 0.0
    %131 = vmatprep.subr.mxu0 0.0
    %132 = vmatpush1.msra.mxu0 0.0
    %133 = vmatprep.mubr.f32.mxu0 0.0
    %134 = vmatmul.mubr.f32.gmra.mrb[0].mxu0 %v64
    %v135 = vpop.f32.mrb[0].mxu0
    %v136 = vadd.f32 %v60, %v135
    %v137 = vpop.f32.mrb[0].mxu0
    %138 = vmatprep.mubr.f32.mxu0 0.0
    %139 = vmatmul.mubr.f32.gmra.mrb[0].mxu0 %v67
    %v140 = vpop.f32.mrb[0].mxu0
    %v141 = vadd.f32 %v60, %v140
    %v142 = vpop.f32.mrb[0].mxu0
    %143 = vdwg.mxu0
    %v144 = vmax.f32 %v136, 0.0
    %v145 = vmax.f32 %v141, 0.0
    %v146 = vld [vmem:[#allocation5] sm:$0xff]
    %v147 = vld [vmem:[#allocation5 + $0x8] sm:$0xff]
    %v148 = vld [vmem:[#allocation5 + $0x10] sm:$0xff]
    %v149 = vld [vmem:[#allocation5 + $0x18] sm:$0xff]
    %v150 = vld [vmem:[%s4] sm:$0x1]
    %v152 = vlaneseq
    %v153 = vshrl.u32 %v152, 7
    %v154 = vsub.s32 0, %v153
    %v155 = vrot.slane %v150, %v154
    %v158 = vsel %vm62, %v144, 0
    %v161 = vsel %vm62, %v145, 0
    %163 = vmatprep.subr.mxu0 0.0
    %164 = vmatpush1.msra.mxu0 %v146
    %165 = vmatprep.subr.mxu0 0.0
    %166 = vmatpush1.msra.mxu0 %v147
    %167 = vmatprep.subr.mxu0 0.0
    %168 = vmatpush1.msra.mxu0 %v148
    %169 = vmatprep.subr.mxu0 0.0
    %170 = vmatpush1.msra.mxu0 %v149
    %171 = vmatprep.subr.mxu0 0.0
    %172 = vmatpush1.msra.mxu0 0.0
    %173 = vmatprep.subr.mxu0 0.0
    %174 = vmatpush1.msra.mxu0 0.0
    %175 = vmatprep.subr.mxu0 0.0
    %176 = vmatpush1.msra.mxu0 0.0
    %177 = vmatprep.subr.mxu0 0.0
    %178 = vmatpush1.msra.mxu0 0.0
    %179 = vmatprep.subr.mxu0 0.0
    %180 = vmatpush1.msra.mxu0 0.0
    %181 = vmatprep.subr.mxu0 0.0
    %182 = vmatpush1.msra.mxu0 0.0
    %183 = vmatprep.subr.mxu0 0.0
    %184 = vmatpush1.msra.mxu0 0.0
    %185 = vmatprep.subr.mxu0 0.0
    %186 = vmatpush1.msra.mxu0 0.0
    %187 = vmatprep.subr.mxu0 0.0
    %188 = vmatpush1.msra.mxu0 0.0
    %189 = vmatprep.subr.mxu0 0.0
    %190 = vmatpush1.msra.mxu0 0.0
    %191 = vmatprep.subr.mxu0 0.0
    %192 = vmatpush1.msra.mxu0 0.0
    %193 = vmatprep.subr.mxu0 0.0
    %194 = vmatpush1.msra.mxu0 0.0
    %195 = vmatprep.subr.mxu0 0.0
    %196 = vmatpush1.msra.mxu0 0.0
    %197 = vmatprep.subr.mxu0 0.0
    %198 = vmatpush1.msra.mxu0 0.0
    %199 = vmatprep.subr.mxu0 0.0
    %200 = vmatpush1.msra.mxu0 0.0
    %201 = vmatprep.subr.mxu0 0.0
    %202 = vmatpush1.msra.mxu0 0.0
    %203 = vmatprep.subr.mxu0 0.0
    %204 = vmatpush1.msra.mxu0 0.0
    %205 = vmatprep.subr.mxu0 0.0
    %206 = vmatpush1.msra.mxu0 0.0
    %207 = vmatprep.subr.mxu0 0.0
    %208 = vmatpush1.msra.mxu0 0.0
    %209 = vmatprep.subr.mxu0 0.0
    %210 = vmatpush1.msra.mxu0 0.0
    %211 = vmatprep.subr.mxu0 0.0
    %212 = vmatpush1.msra.mxu0 0.0
    %213 = vmatprep.subr.mxu0 0.0
    %214 = vmatpush1.msra.mxu0 0.0
    %215 = vmatprep.subr.mxu0 0.0
    %216 = vmatpush1.msra.mxu0 0.0
    %217 = vmatprep.subr.mxu0 0.0
    %218 = vmatpush1.msra.mxu0 0.0
    %219 = vmatprep.subr.mxu0 0.0
    %220 = vmatpush1.msra.mxu0 0.0
    %221 = vmatprep.subr.mxu0 0.0
    %222 = vmatpush1.msra.mxu0 0.0
    %223 = vmatprep.subr.mxu0 0.0
    %224 = vmatpush1.msra.mxu0 0.0
    %225 = vmatprep.subr.mxu0 0.0
    %226 = vmatpush1.msra.mxu0 0.0
    %227 = vmatprep.mubr.f32.mxu0 0.0
    %228 = vmatmul.mubr.f32.gmra.mrb[0].mxu0 %v158
    %v229 = vpop.f32.mrb[0].mxu0
    %v230 = vadd.f32 %v155, %v229
    %v231 = vpop.f32.mrb[0].mxu0
    %232 = vmatprep.mubr.f32.mxu0 0.0
    %233 = vmatmul.mubr.f32.gmra.mrb[0].mxu0 %v161
    %v234 = vpop.f32.mrb[0].mxu0
    %v235 = vadd.f32 %v155, %v234
    %v236 = vpop.f32.mrb[0].mxu0
    %237 = vdwg.mxu0
    %v238 = vadd.f32 %v230, %v49
    %v239 = vadd.f32 %v235, %v50
    %240 = vst.msk [vmem:[#allocation7] sm:$0xff] %vm62, %v238
    %241 = vst.msk [vmem:[#allocation7 + $0x8] sm:$0xff] %vm62, %v239
    // Predicated region
    $region30: #{tpu_custom_call.1} parent=1 // pred_check
      _
    $region31: #{tpu_custom_call.1} parent=1 // pred_check_branch
      %243 = sbr.rel (0) target = $region33
    $region32: #{tpu_custom_call.1} parent=1 // pred_region
      %s245 = ssub.s32 256, 256
      %246 = vsyncadd [#allocation4], %s245
      %s247 = sshll.u32 [#allocation7], 4
      %s248 = int_to_ptr.vmem [resolvable:$true] %s247
      %253 = dma.vmem_to_hbm [thread:$0]  %s248, 256, %s5, [#allocation4], 128, 128, 8
    $region33: #{tpu_custom_call.1} parent=1 // pred_fallthru
      _
    // Predicated region
    $region34: #{tpu_custom_call.1} parent=1 // pred_check
      _
    $region35: #{tpu_custom_call.1} parent=1 // pred_check_branch
      %255 = sbr.rel (0) target = $region37
    $region36: #{tpu_custom_call.1} parent=1 // pred_region
      %256 = dma.done [#allocation4], 256
    $region37: #{tpu_custom_call.1} parent=1 // pred_fallthru
      _
    %257 = vsyncpa [#allocation3], 1
    %258 = vsyncpa [#allocation6], 1
    %259 = vsyncpa [#allocation4], 1

</llo_original>
